<compile_context>
chip_gen: v6e
topology: v6e:2x2x1
jax: 0.10.0
libtpu: 0.0.40
codegen_flags: <defaults>
</compile_context>

<pallas_src>
import math

import jax
import jax.numpy as jnp
from jax.experimental import pallas as pl
from jax.experimental.pallas import tpu as pltpu

_BN_EPS = 1e-5
_TILE_B = 512  # batch tile (multiple of 8); amortizes ~0.35 us/step overhead


def _make_fused_mlp_kernel(n_hidden):
    """Fused kernel: n_hidden x (Linear+BN-folded+ReLU) then 1-unit head + Sigmoid.

    Ref order: x, (w0, b0), ..., (w_{n-1}, b_{n-1}), (w_head_row, b_head), o
    Hidden weights bf16 (MXU operands), biases f32; head weight row f32.
    All post-matmul math stays in f32 (v5e-safe).  The head is a VPU mul +
    XLU lane reduce -> (TILE_B, 1) store, no padded output slab.
    """

    def kernel(*refs):
        x_ref = refs[0]
        o_ref = refs[-1]

        h = x_ref[...].astype(jnp.bfloat16)          # activations feed MXU in bf16
        idx = 1
        for _ in range(n_hidden):                    # statically unrolled at trace
            w_ref, b_ref = refs[idx], refs[idx + 1]
            idx += 2
            y = jnp.dot(h, w_ref[...], preferred_element_type=jnp.float32)
            y = jnp.maximum(y + b_ref[...], 0.0)     # f32 bias + ReLU on VPU
            h = y.astype(jnp.bfloat16)

        w_ref, b_ref = refs[idx], refs[idx + 1]      # (1, prev) f32, (1, 1) f32
        y = jnp.sum(h.astype(jnp.float32) * w_ref[...], axis=-1, keepdims=True)
        o_ref[...] = jax.nn.sigmoid(y + b_ref[...])  # (TILE_B, 1): 4 B/row writeback

    return kernel


def _fused_forward(x, params):
    """params: [(w_bf16, b_f32), ...] hidden layers + (w_row_f32, b_f32) head."""
    B, input_dim = x.shape
    n_hidden = len(params) - 1

    tile_b = _TILE_B if B >= _TILE_B else max(8, ((B + 7) // 8) * 8)
    b_pad = pl.cdiv(B, tile_b) * tile_b
    if b_pad != B:
        x = jnp.pad(x, ((0, b_pad - B), (0, 0)))
    grid = (b_pad // tile_b,)

    flat_inputs = [x]
    in_specs = [pl.BlockSpec((tile_b, input_dim), lambda i: (i, 0))]
    for w, b in params:
        flat_inputs.extend((w, b))
        # Full-array, grid-invariant blocks: DMA'd once, VMEM-resident across steps.
        in_specs.append(pl.BlockSpec(w.shape, lambda i: (0, 0)))
        in_specs.append(pl.BlockSpec(b.shape, lambda i: (0, 0)))
    out_specs = pl.BlockSpec((tile_b, 1), lambda i: (i, 0))

    # --- VMEM budget / footprint guard (v7x has only 64 MiB physical VMEM) ---
    nbytes = lambda a: a.size * a.dtype.itemsize
    w_bytes = sum(nbytes(w) + nbytes(b) for w, b in params)
    tile_bytes = 2 * (tile_b * input_dim * 4 + tile_b * 4)  # double-buffered x/out tiles
    # TODO(synk): if w_bytes approaches ~40 MiB (very wide hidden_dims), switch the
    # large layers to a K/N-tiled grid axis (or pltpu.emit_pipeline) instead of
    # fully VMEM-resident weight blocks.
    assert w_bytes < (40 << 20), "weights too large for fully VMEM-resident path"
    vmem_limit = int(min(max(2 * w_bytes + 2 * tile_bytes + (8 << 20), 16 << 20), 48 << 20))

    # --- cost estimate so XLA can schedule/overlap this ~us-scale call ---
    flops = 0
    prev = input_dim
    for w, _ in params[:-1]:
        flops += 2 * b_pad * prev * w.shape[1]
        prev = w.shape[1]
    flops += 2 * b_pad * prev  # head mul + reduce
    bytes_accessed = nbytes(x) + w_bytes + b_pad * 4

    out = pl.pallas_call(
        _make_fused_mlp_kernel(n_hidden),
        out_shape=jax.ShapeDtypeStruct((b_pad, 1), jnp.float32),
        grid=grid,
        in_specs=in_specs,
        out_specs=out_specs,
        compiler_params=pltpu.CompilerParams(
            dimension_semantics=("parallel",),   # v7x: shard batch tiles over both TCs
            vmem_limit_bytes=vmem_limit,
        ),
        cost_estimate=pl.CostEstimate(
            flops=int(flops),
            transcendentals=int(b_pad),
            bytes_accessed=int(bytes_accessed),
        ),
    )(*flat_inputs)
    return out[:B]


class PredictionHeadPallas:
    """JAX/Pallas equivalent of the PyTorch PredictionHead (eval mode)."""

    def __init__(self, input_dim, hidden_dims, key, dropout=0.2):
        # TODO(synk): dropout is identity in eval mode; training-mode RNG dropout
        # and training-mode BatchNorm batch statistics are not implemented.
        del dropout
        self.params = []        # BN-folded params fed to the kernel
        self._ref_hidden = []   # raw f32 params for the unfolded reference
        prev = input_dim
        for hd in hidden_dims:
            key, kw, kb, kg, kbe, km, kv = jax.random.split(key, 7)
            bound = 1.0 / math.sqrt(prev)
            w = jax.random.uniform(kw, (prev, hd), jnp.float32, -bound, bound)
            b = jax.random.uniform(kb, (1, hd), jnp.float32, -bound, bound)
            gamma = 1.0 + 0.1 * jax.random.normal(kg, (1, hd), jnp.float32)
            beta = 0.1 * jax.random.normal(kbe, (1, hd), jnp.float32)
            mean = 0.1 * jax.random.normal(km, (1, hd), jnp.float32)
            var = jax.random.uniform(kv, (1, hd), jnp.float32, 0.5, 1.5)

            # Fold BatchNorm (running stats) into the Linear.
            s = gamma * jax.lax.rsqrt(var + _BN_EPS)          # [1, hd]
            w_fold = (w * s).astype(jnp.bfloat16)             # [prev, hd] bf16 (MXU)
            b_fold = (b - mean) * s + beta                    # [1, hd] f32

            self.params.append((w_fold, b_fold))
            self._ref_hidden.append((w, b, gamma, beta, mean, var))
            prev = hd

        key, kw, kb = jax.random.split(key, 3)
        bound = 1.0 / math.sqrt(prev)
        w_out = jax.random.uniform(kw, (prev, 1), jnp.float32, -bound, bound)
        b_out = jax.random.uniform(kb, (1, 1), jnp.float32, -bound, bound)
        # Head kept as an f32 (1, prev) row: kernel does VPU mul + lane reduce,
        # avoiding any zero-padded 128-wide output slab.
        self.params.append((w_out.T, b_out))
        self._w_out, self._b_out = w_out, b_out

    def __call__(self, x):
        return _fused_forward(x, self.params)

    # Pure-JAX reference matching the kernel's numerics (folded BN, bf16 MXU
    # inputs, f32 accumulation/epilogue, f32 head row).
    def reference(self, x):
        h = x.astype(jnp.bfloat16)
        for w, b in self.params[:-1]:
            y = jnp.dot(h, w, preferred_element_type=jnp.float32) + b
            h = jnp.maximum(y, 0.0).astype(jnp.bfloat16)
        w_row, b = self.params[-1]
        y = jnp.sum(h.astype(jnp.float32) * w_row, axis=-1, keepdims=True) + b
        return jax.nn.sigmoid(y)

    # Full-f32, un-folded reference (semantics of the original PyTorch module).
    def reference_f32(self, x):
        h = x
        for (w, b, gamma, beta, mean, var) in self._ref_hidden:
            y = h @ w + b
            y = (y - mean) * jax.lax.rsqrt(var + _BN_EPS) * gamma + beta
            h = jnp.maximum(y, 0.0)
        return jax.nn.sigmoid(h @ self._w_out + self._b_out)


if __name__ == "__main__":
    key = jax.random.PRNGKey(0)
    k_x, k_params = jax.random.split(key)

    batch, input_dim = 8, 32
    hidden_dims = [64, 32]

    x = jax.random.normal(k_x, (batch, input_dim), jnp.float32)
    model = PredictionHeadPallas(input_dim, hidden_dims, k_params)

    # Small-batch path (single grid step).
    out = jax.block_until_ready(model(x))
    assert out.shape == (batch, 1)

    ref = model.reference(x)
    assert jnp.allclose(out, ref, rtol=1e-3, atol=1e-4), "mismatch vs matched reference"

    ref_f32 = model.reference_f32(x)
    assert jnp.allclose(out, ref_f32, rtol=2e-2, atol=2e-2), "mismatch vs f32 reference"

    # Multi-tile batch-grid path (exercises tiling, padding, resident weights).
    x_big = jax.random.normal(jax.random.PRNGKey(1), (1030, input_dim), jnp.float32)
    out_big = jax.block_until_ready(model(x_big))
    assert out_big.shape == (1030, 1)
    ref_big = model.reference(x_big)
    assert jnp.allclose(out_big, ref_big, rtol=1e-3, atol=1e-4), "mismatch (tiled path)"

    print("KERNEL_OK")
</pallas_src>

<mosaic_0001>
module attributes {stable_mosaic.version = 11 : i64} {
  func.func @kernel(%arg0: i32, %arg1: memref<8x32xf32, #tpu.memory_space<vmem>>, %arg2: memref<32x64xbf16, #tpu.memory_space<vmem>>, %arg3: memref<1x64xf32, #tpu.memory_space<vmem>>, %arg4: memref<64x32xbf16, #tpu.memory_space<vmem>>, %arg5: memref<1x32xf32, #tpu.memory_space<vmem>>, %arg6: memref<1x32xf32, #tpu.memory_space<vmem>>, %arg7: memref<1x1xf32, #tpu.memory_space<vmem>>, %arg8: memref<8x1xf32, #tpu.memory_space<vmem>>) attributes {dimension_semantics = [#tpu.dimension_semantics<parallel>], iteration_bounds = array<i64: 1>, scalar_prefetch = 0 : i64, scratch_operands = 0 : i64, tpu.core_type = #tpu.core_type<tc>, window_params = [{transform_indices = @transform_0, window_bounds = array<i64: 8, 32>}, {pipeline_mode = #tpu.pipeline_mode<synchronous>, transform_indices = @transform_1, window_bounds = array<i64: 32, 64>}, {pipeline_mode = #tpu.pipeline_mode<synchronous>, transform_indices = @transform_2, window_bounds = array<i64: 1, 64>}, {pipeline_mode = #tpu.pipeline_mode<synchronous>, transform_indices = @transform_3, window_bounds = array<i64: 64, 32>}, {pipeline_mode = #tpu.pipeline_mode<synchronous>, transform_indices = @transform_4, window_bounds = array<i64: 1, 32>}, {pipeline_mode = #tpu.pipeline_mode<synchronous>, transform_indices = @transform_5, window_bounds = array<i64: 1, 32>}, {pipeline_mode = #tpu.pipeline_mode<synchronous>, transform_indices = @transform_6, window_bounds = array<i64: 1, 1>}, {transform_indices = @transform_7, window_bounds = array<i64: 8, 1>}]} {
    %c0 = arith.constant 0 : index
    %c0_0 = arith.constant 0 : index
    %0 = vector.load %arg1[%c0, %c0_0] : memref<8x32xf32, #tpu.memory_space<vmem>>, vector<8x32xf32>
    %1 = arith.truncf %0 : vector<8x32xf32> to vector<8x32xbf16>
    %c0_1 = arith.constant 0 : index
    %c0_2 = arith.constant 0 : index
    %2 = vector.load %arg2[%c0_1, %c0_2] : memref<32x64xbf16, #tpu.memory_space<vmem>>, vector<32x64xbf16>
    %cst = arith.constant dense<0.000000e+00> : vector<8x64xf32>
    %3 = tpu.matmul %1, %2, %cst {dimension_numbers = #tpu.dot_dimension_numbers<[1], [0], [0], [1], [0, 0, 1, 1], [], []>} : vector<8x32xbf16>, vector<32x64xbf16>, vector<8x64xf32> -> vector<8x64xf32>
    %c0_3 = arith.constant 0 : index
    %c0_4 = arith.constant 0 : index
    %4 = vector.load %arg3[%c0_3, %c0_4] : memref<1x64xf32, #tpu.memory_space<vmem>>, vector<1x64xf32>
    %5 = vector.broadcast %4 : vector<1x64xf32> to vector<8x64xf32>
    %6 = arith.addf %3, %5 : vector<8x64xf32>
    %cst_5 = arith.constant 0.000000e+00 : f32
    %7 = vector.broadcast %cst_5 : f32 to vector<8x64xf32>
    %8 = arith.maximumf %6, %7 : vector<8x64xf32>
    %9 = arith.truncf %8 : vector<8x64xf32> to vector<8x64xbf16>
    %c0_6 = arith.constant 0 : index
    %c0_7 = arith.constant 0 : index
    %10 = vector.load %arg4[%c0_6, %c0_7] : memref<64x32xbf16, #tpu.memory_space<vmem>>, vector<64x32xbf16>
    %cst_8 = arith.constant dense<0.000000e+00> : vector<8x32xf32>
    %11 = tpu.matmul %9, %10, %cst_8 {dimension_numbers = #tpu.dot_dimension_numbers<[1], [0], [0], [1], [0, 0, 1, 1], [], []>} : vector<8x64xbf16>, vector<64x32xbf16>, vector<8x32xf32> -> vector<8x32xf32>
    %c0_9 = arith.constant 0 : index
    %c0_10 = arith.constant 0 : index
    %12 = vector.load %arg5[%c0_9, %c0_10] : memref<1x32xf32, #tpu.memory_space<vmem>>, vector<1x32xf32>
    %13 = vector.broadcast %12 : vector<1x32xf32> to vector<8x32xf32>
    %14 = arith.addf %11, %13 : vector<8x32xf32>
    %cst_11 = arith.constant 0.000000e+00 : f32
    %15 = vector.broadcast %cst_11 : f32 to vector<8x32xf32>
    %16 = arith.maximumf %14, %15 : vector<8x32xf32>
    %17 = arith.truncf %16 : vector<8x32xf32> to vector<8x32xbf16>
    %18 = arith.extf %17 : vector<8x32xbf16> to vector<8x32xf32>
    %c0_12 = arith.constant 0 : index
    %c0_13 = arith.constant 0 : index
    %19 = vector.load %arg6[%c0_12, %c0_13] : memref<1x32xf32, #tpu.memory_space<vmem>>, vector<1x32xf32>
    %20 = vector.broadcast %19 : vector<1x32xf32> to vector<8x32xf32>
    %21 = arith.mulf %18, %20 : vector<8x32xf32>
    %cst_14 = arith.constant dense<0.000000e+00> : vector<8xf32>
    %22 = vector.multi_reduction <add>, %21, %cst_14 [1] : vector<8x32xf32> to vector<8xf32>
    %23 = vector.shape_cast %22 : vector<8xf32> to vector<8x1xf32>
    %c0_15 = arith.constant 0 : index
    %c0_16 = arith.constant 0 : index
    %24 = vector.load %arg7[%c0_15, %c0_16] : memref<1x1xf32, #tpu.memory_space<vmem>>, vector<1x1xf32>
    %25 = vector.broadcast %24 : vector<1x1xf32> to vector<8x1xf32>
    %26 = arith.addf %23, %25 : vector<8x1xf32>
    %27 = arith.negf %26 : vector<8x1xf32>
    %28 = math.exp %27 : vector<8x1xf32>
    %cst_17 = arith.constant 1.000000e+00 : f32
    %29 = vector.broadcast %cst_17 : f32 to vector<8x1xf32>
    %30 = arith.addf %29, %28 : vector<8x1xf32>
    %31 = arith.divf %29, %30 : vector<8x1xf32>
    %c0_18 = arith.constant 0 : index
    %c0_19 = arith.constant 0 : index
    %32 = vector.load %arg8[%c0_18, %c0_19] : memref<8x1xf32, #tpu.memory_space<vmem>>, vector<8x1xf32>
    tpu.vector_store %arg8[%c0_18, %c0_19], %31 {strides = array<i32>} : memref<8x1xf32, #tpu.memory_space<vmem>>, vector<8x1xf32>,
    return
  }
  func.func @transform_0(%arg0: i32) -> (i32, i32) {
    %c0_i32 = arith.constant 0 : i32
    %c0_i32_0 = arith.constant 0 : i32
    return %arg0, %c0_i32 : i32, i32
  }
  func.func @transform_1(%arg0: i32) -> (i32, i32) {
    %c0_i32 = arith.constant 0 : i32
    %c0_i32_0 = arith.constant 0 : i32
    %c0_i32_1 = arith.constant 0 : i32
    return %c0_i32, %c0_i32_0 : i32, i32
  }
  func.func @transform_2(%arg0: i32) -> (i32, i32) {
    %c0_i32 = arith.constant 0 : i32
    %c0_i32_0 = arith.constant 0 : i32
    %c0_i32_1 = arith.constant 0 : i32
    return %c0_i32, %c0_i32_0 : i32, i32
  }
  func.func @transform_3(%arg0: i32) -> (i32, i32) {
    %c0_i32 = arith.constant 0 : i32
    %c0_i32_0 = arith.constant 0 : i32
    %c0_i32_1 = arith.constant 0 : i32
    return %c0_i32, %c0_i32_0 : i32, i32
  }
  func.func @transform_4(%arg0: i32) -> (i32, i32) {
    %c0_i32 = arith.constant 0 : i32
    %c0_i32_0 = arith.constant 0 : i32
    %c0_i32_1 = arith.constant 0 : i32
    return %c0_i32, %c0_i32_0 : i32, i32
  }
  func.func @transform_5(%arg0: i32) -> (i32, i32) {
    %c0_i32 = arith.constant 0 : i32
    %c0_i32_0 = arith.constant 0 : i32
    %c0_i32_1 = arith.constant 0 : i32
    return %c0_i32, %c0_i32_0 : i32, i32
  }
  func.func @transform_6(%arg0: i32) -> (i32, i32) {
    %c0_i32 = arith.constant 0 : i32
    %c0_i32_0 = arith.constant 0 : i32
    %c0_i32_1 = arith.constant 0 : i32
    return %c0_i32, %c0_i32_0 : i32, i32
  }
  func.func @transform_7(%arg0: i32) -> (i32, i32) {
    %c0_i32 = arith.constant 0 : i32
    %c0_i32_0 = arith.constant 0 : i32
    return %arg0, %c0_i32 : i32, i32
  }
}

</mosaic_0001>

<llo_original>
// kernel: tpu_custom_call.1
$region0: #{tpu_custom_call.1}
  #allocation0 [shape = 'u32[]', space=smem, size = 0x4, offset = 0x4, fixed_abs, tag = 'smem constant byte address 0x4 - core index']
  #allocation1 [shape = 'u32[144,128]{1,0:T(1,128)}', space=vmem, size = 0x12000, scoped, tag = 'internal scratch']
  #allocation2 [shape = 'f32[1,1]{1,0:T(1,128)S(1)}', space=vmem, size = 0x200, scoped, tag = 'scoped memory for tpu_custom_call.1']
  %s0 = inlined_call_operand.vmem [shape: f32[8,32], index: 0, kind: input, shape index: {}]
  %s1 = inlined_call_operand.vmem [shape: bf16[32,64], index: 1, kind: input, shape index: {}]
  %s2 = inlined_call_operand.vmem [shape: f32[1,64], index: 2, kind: input, shape index: {}]
  %s3 = inlined_call_operand.vmem [shape: bf16[64,32], index: 3, kind: input, shape index: {}]
  %s4 = inlined_call_operand.vmem [shape: f32[1,32], index: 4, kind: input, shape index: {}]
  %s5 = inlined_call_operand.vmem [shape: f32[1,32], index: 5, kind: input, shape index: {}]
  %s6 = inlined_call_operand.<no memory space> [shape: f32[1,1], index: 6, kind: input, shape index: {}]
  %s7 = inlined_call_operand.vmem [shape: f32[8,1], index: 7, kind: output, shape index: {}]
  %s8 = sld [smem:[#allocation0]]
  $region38: #{tpu_custom_call.1} parent=0
    _
  %s10 = ssub.s32 1, %s8
  %s11 = scalar_select 0, %s10, %s8
  %v12 = vstv %s6
  %13 = vst [vmem:[#allocation2] sm:$0x1] %v12
  // Predicated region
  $region2: #{tpu_custom_call.1} parent=0 // pred_check
    _
  $region3: #{tpu_custom_call.1} parent=0 // pred_check_branch
    %15 = sbr.rel (0) target = $region5
  $region4: #{tpu_custom_call.1} parent=0 // pred_region
    _
  $region5: #{tpu_custom_call.1} parent=0 // pred_fallthru
    _
  // Predicated region
  $region6: #{tpu_custom_call.1} parent=0 // pred_check
    _
  $region7: #{tpu_custom_call.1} parent=0 // pred_check_branch
    %17 = sbr.rel (0) target = $region9
  $region8: #{tpu_custom_call.1} parent=0 // pred_region
    _
  $region9: #{tpu_custom_call.1} parent=0 // pred_fallthru
    _
  // Predicated region
  $region10: #{tpu_custom_call.1} parent=0 // pred_check
    _
  $region11: #{tpu_custom_call.1} parent=0 // pred_check_branch
    %19 = sbr.rel (0) target = $region13
  $region12: #{tpu_custom_call.1} parent=0 // pred_region
    _
  $region13: #{tpu_custom_call.1} parent=0 // pred_fallthru
    _
  // Predicated region
  $region14: #{tpu_custom_call.1} parent=0 // pred_check
    _
  $region15: #{tpu_custom_call.1} parent=0 // pred_check_branch
    %21 = sbr.rel (0) target = $region17
  $region16: #{tpu_custom_call.1} parent=0 // pred_region
    _
  $region17: #{tpu_custom_call.1} parent=0 // pred_fallthru
    _
  // Predicated region
  $region18: #{tpu_custom_call.1} parent=0 // pred_check
    _
  $region19: #{tpu_custom_call.1} parent=0 // pred_check_branch
    %23 = sbr.rel (0) target = $region21
  $region20: #{tpu_custom_call.1} parent=0 // pred_region
    _
  $region21: #{tpu_custom_call.1} parent=0 // pred_fallthru
    _
  // Predicated region
  $region22: #{tpu_custom_call.1} parent=0 // pred_check
    _
  $region23: #{tpu_custom_call.1} parent=0 // pred_check_branch
    %25 = sbr.rel (0) target = $region25
  $region24: #{tpu_custom_call.1} parent=0 // pred_region
    _
  $region25: #{tpu_custom_call.1} parent=0 // pred_fallthru
    _
  // Predicated region
  $region26: #{tpu_custom_call.1} parent=0 // pred_check
    _
  $region27: #{tpu_custom_call.1} parent=0 // pred_check_branch
    %27 = sbr.rel (0) target = $region29
  $region28: #{tpu_custom_call.1} parent=0 // pred_region
    _
  $region29: #{tpu_custom_call.1} parent=0 // pred_fallthru
    _
  %v29 = vld [vmem:[%s0] sm:$0xff]
  %v30 = vpack.c.bf16 %v29, %v29
  %v31 = vld [vmem:[%s1] sm:$0xf]
  %v32 = vld [vmem:[%s1 + $0x4] sm:$0xf]
  %v33 = vld [vmem:[%s1 + $0x8] sm:$0xf]
  %v34 = vld [vmem:[%s1 + $0xc] sm:$0xf]
  %v35 = vld [vmem:[%s2] sm:$0x1]
  %v37 = vlaneseq
  %v38 = vshrl.u32 %v37, 7
  %v39 = vsub.s32 0, %v38
  %v40 = vrot.slane %v35, %v39
  %v46 = vunpack.c.l.b16 %v31
  %v47 = vunpack.c.l.b16 %v32
  %v48 = vunpack.c.l.b16 %v33
  %v49 = vunpack.c.l.b16 %v34
  %v50 = vpack.c.b16 %v47, %v46
  %v51 = vpack.c.b16 %v49, %v48
  %vm54 = vcmask 261120
  %v56 = vsel %vm54, %v30, 0
  %58 = vmatprep.subr.bf16.mxu0 0
  %59 = vmatpush1.bf16.msra.mxu0 0
  %60 = vmatprep.subr.bf16.mxu0 0
  %61 = vmatpush1.bf16.msra.mxu0 0
  %62 = vmatprep.subr.bf16.mxu0 0
  %63 = vmatpush1.bf16.msra.mxu0 0
  %64 = vmatprep.subr.bf16.mxu0 0
  %65 = vmatpush1.bf16.msra.mxu0 0
  %66 = vmatprep.subr.bf16.mxu0 0
  %67 = vmatpush1.bf16.msra.mxu0 0
  %68 = vmatprep.subr.bf16.mxu0 0
  %69 = vmatpush1.bf16.msra.mxu0 0
  %70 = vmatprep.subr.bf16.mxu0 0
  %71 = vmatpush1.bf16.msra.mxu0 %v51
  %72 = vmatprep.subr.bf16.mxu0 0
  %73 = vmatpush1.bf16.msra.mxu0 %v50
  %74 = vmatprep.subr.bf16.mxu0 0
  %75 = vmatpush2.bf16.msra.mxu0 0
  %76 = vmatprep.subr.bf16.mxu0 0
  %77 = vmatpush2.bf16.msra.mxu0 0
  %78 = vmatprep.subr.bf16.mxu0 0
  %79 = vmatpush2.bf16.msra.mxu0 0
  %80 = vmatprep.subr.bf16.mxu0 0
  %81 = vmatpush2.bf16.msra.mxu0 0
  %82 = vmatprep.subr.bf16.mxu0 0
  %83 = vmatpush2.bf16.msra.mxu0 0
  %84 = vmatprep.subr.bf16.mxu0 0
  %85 = vmatpush2.bf16.msra.mxu0 0
  %86 = vmatprep.subr.bf16.mxu0 0
  %87 = vmatpush2.bf16.msra.mxu0 0
  %88 = vmatprep.subr.bf16.mxu0 0
  %89 = vmatpush2.bf16.msra.mxu0 0
  %90 = vmatprep.mubr.bf16.mxu0 0
  %91 = vmatmul.mubr.bf16.gmra.mxu0 %v56
  %v92 = vpop.f32.mrf.mxu0
  %v93 = vadd.f32 %v40, %v92
  %v94 = vpop.f32.mrf.mxu0
  %v95 = vpop.f32.mrf.mxu0
  %v96 = vpop.f32.mrf.mxu0
  %97 = vdwg.mxu0
  %v98 = vmax.f32 %v93, 0.0
  %v99 = vpack.c.bf16 %v98, %v98
  %v100 = vld [vmem:[%s3] sm:$0xf]
  %v101 = vld [vmem:[%s3 + $0x4] sm:$0xf]
  %v102 = vld [vmem:[%s3 + $0x8] sm:$0xf]
  %v103 = vld [vmem:[%s3 + $0xc] sm:$0xf]
  %v104 = vld [vmem:[%s3 + $0x10] sm:$0xf]
  %v105 = vld [vmem:[%s3 + $0x14] sm:$0xf]
  %v106 = vld [vmem:[%s3 + $0x18] sm:$0xf]
  %v107 = vld [vmem:[%s3 + $0x1c] sm:$0xf]
  %v108 = vld [vmem:[%s4] sm:$0x1]
  %v110 = vlaneseq
  %v111 = vshrl.u32 %v110, 7
  %v112 = vsub.s32 0, %v111
  %v113 = vrot.slane %v108, %v112
  %v123 = vunpack.c.l.b16 %v100
  %v124 = vunpack.c.l.b16 %v101
  %v125 = vunpack.c.l.b16 %v102
  %v126 = vunpack.c.l.b16 %v103
  %v127 = vunpack.c.l.b16 %v104
  %v128 = vunpack.c.l.b16 %v105
  %v129 = vunpack.c.l.b16 %v106
  %v130 = vunpack.c.l.b16 %v107
  %v131 = vpack.c.b16 %v124, %v123
  %v132 = vpack.c.b16 %v126, %v125
  %v133 = vpack.c.b16 %v128, %v127
  %v134 = vpack.c.b16 %v130, %v129
  %vm139 = vcmask 523264
  %v141 = vsel %vm139, %v99, 0
  %143 = vmatprep.subr.bf16.mxu0 0
  %144 = vmatpush1.bf16.msra.mxu0 0
  %145 = vmatprep.subr.bf16.mxu0 0
  %146 = vmatpush1.bf16.msra.mxu0 0
  %147 = vmatprep.subr.bf16.mxu0 0
  %148 = vmatpush1.bf16.msra.mxu0 0
  %149 = vmatprep.subr.bf16.mxu0 0
  %150 = vmatpush1.bf16.msra.mxu0 0
  %151 = vmatprep.subr.bf16.mxu0 0
  %152 = vmatpush1.bf16.msra.mxu0 %v134
  %153 = vmatprep.subr.bf16.mxu0 0
  %154 = vmatpush1.bf16.msra.mxu0 %v133
  %155 = vmatprep.subr.bf16.mxu0 0
  %156 = vmatpush1.bf16.msra.mxu0 %v132
  %157 = vmatprep.subr.bf16.mxu0 0
  %158 = vmatpush1.bf16.msra.mxu0 %v131
  %159 = vmatprep.subr.bf16.mxu0 0
  %160 = vmatpush2.bf16.msra.mxu0 0
  %161 = vmatprep.subr.bf16.mxu0 0
  %162 = vmatpush2.bf16.msra.mxu0 0
  %163 = vmatprep.subr.bf16.mxu0 0
  %164 = vmatpush2.bf16.msra.mxu0 0
  %165 = vmatprep.subr.bf16.mxu0 0
  %166 = vmatpush2.bf16.msra.mxu0 0
  %167 = vmatprep.subr.bf16.mxu0 0
  %168 = vmatpush2.bf16.msra.mxu0 0
  %169 = vmatprep.subr.bf16.mxu0 0
  %170 = vmatpush2.bf16.msra.mxu0 0
  %171 = vmatprep.subr.bf16.mxu0 0
  %172 = vmatpush2.bf16.msra.mxu0 0
  %173 = vmatprep.subr.bf16.mxu0 0
  %174 = vmatpush2.bf16.msra.mxu0 0
  %175 = vmatprep.mubr.bf16.mxu0 0
  %176 = vmatmul.mubr.bf16.gmra.mxu0 %v141
  %v177 = vpop.f32.mrf.mxu0
  %v178 = vadd.f32 %v113, %v177
  %v179 = vpop.f32.mrf.mxu0
  %v180 = vpop.f32.mrf.mxu0
  %v181 = vpop.f32.mrf.mxu0
  %182 = vdwg.mxu0
  %v183 = vmax.f32 %v178, 0.0
  %v184 = vpack.c.bf16 %v183, %v183
  %v185 = vunpack.c.l.bf16 %v184
  %v186 = vld [vmem:[%s5] sm:$0x1]
  %v188 = vlaneseq
  %v189 = vshrl.u32 %v188, 7
  %v190 = vsub.s32 0, %v189
  %v191 = vrot.slane %v186, %v190
  %v193 = vmul.f32 %v185, %v191
  %v194 = vsel %vm54, %v193, 0.0
  %195 = vadd.xlane.f32.xlu0 %v194
  %v196 = vpop.xlane.xlu0 %195
  %v197 = vld [vmem:[#allocation2] sm:$0x1]
  %v199 = vlaneseq
  %v200 = vshrl.u32 %v199, 7
  %v201 = vsub.s32 0, %v200
  %v202 = vrot.slane %v197, %v201
  %v204 = vadd.f32 %v196, %v202
  %v205 = vxor.u32 %v204, 2147483648
  %v206 = vmul.f32 %v205, 1.442695
  %v207 = vpow.pop %v206
  %v208 = vadd.f32 %v207, 1.0
  %v209 = vrcp.pop %v208
  %v210 = vmul.f32 1.0, %v209
  %vm211 = vcmask 7168
  %212 = vst.msk [vmem:[%s7] sm:$0xff] %vm211, %v210
  // Predicated region
  $region30: #{tpu_custom_call.1} parent=0 // pred_check
    _
  $region31: #{tpu_custom_call.1} parent=0 // pred_check_branch
    %214 = sbr.rel (0) target = $region33
  $region32: #{tpu_custom_call.1} parent=0 // pred_region
    _
  $region33: #{tpu_custom_call.1} parent=0 // pred_fallthru
    _
  // Predicated region
  $region34: #{tpu_custom_call.1} parent=0 // pred_check
    _
  $region35: #{tpu_custom_call.1} parent=0 // pred_check_branch
    %216 = sbr.rel (0) target = $region37
  $region36: #{tpu_custom_call.1} parent=0 // pred_region
    _
  $region37: #{tpu_custom_call.1} parent=0 // pred_fallthru
    _

</llo_original>
